<compile_context>
chip_gen: v5e
topology: v5e:2x2
jax: 0.10.0
libtpu: 0.0.40
codegen_flags: <defaults>
</compile_context>

<pallas_src>
import functools

import jax
import jax.numpy as jnp
from jax.experimental import pallas as pl
from jax.experimental.pallas import tpu as pltpu


def _round_up(x, m):
    return (x + m - 1) // m * m


# ------------------------------- kernel -------------------------------------
def _topology_encoder_kernel(beta, inv_batch,
                             tf_ref, padj_ref,
                             w1_ref, b1_ref,
                             w2_ref, b2_ref,
                             w3_ref, b3_ref,
                             out_ref,
                             acc_ref, sig_ref):
    b = pl.program_id(1)
    nb = pl.num_programs(1)

    # ---- first batch slice: init accumulator, hoist sigmoid(physical_adj) --
    @pl.when(b == 0)
    def _():
        acc_ref[...] = jnp.zeros_like(acc_ref)
        # EUP work moved into the DMA-bound streaming steps (EUP slot is idle
        # there), shortening the finalize critical path.
        sig_ref[...] = jax.nn.sigmoid(padj_ref[...].astype(jnp.float32))

    # ---- stream the batch mean: acc += traffic_flow[b, row_tile, :] --------
    acc_ref[...] += tf_ref[...].astype(jnp.float32)

    # ---- last batch slice: mix adjacencies and run the 3-layer GCN ---------
    @pl.when(b == nb - 1)
    def _():
        traffic_adj = acc_ref[...] * inv_batch                      # mean(dim=0)
        adj = sig_ref[...] + beta * jax.nn.sigmoid(traffic_adj)

        # layer 1: relu(adj @ W1 + b1)   [tm, N] @ [N, Hp] -> [tm, Hp]
        x = jnp.dot(adj.astype(w1_ref.dtype), w1_ref[...],
                    preferred_element_type=jnp.float32) + b1_ref[...]
        x = jnp.maximum(x, 0.0)
        # layer 2: relu(x @ W2 + b2)     [tm, Hp] @ [Hp, Hp] -> [tm, Hp]
        x = jnp.dot(x.astype(w2_ref.dtype), w2_ref[...],
                    preferred_element_type=jnp.float32) + b2_ref[...]
        x = jnp.maximum(x, 0.0)
        # layer 3: relu(x @ W3 + b3)
        x = jnp.dot(x.astype(w3_ref.dtype), w3_ref[...],
                    preferred_element_type=jnp.float32) + b3_ref[...]
        x = jnp.maximum(x, 0.0)

        out_ref[...] = x.astype(out_ref.dtype)


# --------------------------- sizing heuristics -------------------------------
def _vmem_bytes(tm, num_nodes, h_pad, tf_itemsize, out_itemsize,
                tf_buffers, w_buffers):
    """Conservative VMEM estimate (pipelined blocks + scratch), with lane/
    sublane layout padding accounted for."""
    n_lane = _round_up(num_nodes, 128)
    tm_sub = _round_up(tm, 8)
    total = tf_buffers * tm_sub * n_lane * max(tf_itemsize, 2)     # traffic tiles
    total += 2 * tm_sub * n_lane * 4                               # physical_adj rows
    total += 2 * tm_sub * h_pad * max(out_itemsize, 2)             # output rows
    total += w_buffers * (_round_up(num_nodes, 16) * h_pad
                          + 2 * h_pad * h_pad) * 2                 # bf16 weights
    total += w_buffers * 3 * 8 * h_pad * 4                         # biases (padded)
    total += 2 * tm_sub * n_lane * 4                               # acc + sigmoid scratch
    return total


def _pick_row_tile(num_nodes, h_pad, tf_itemsize, out_itemsize,
                   w_buffers, budget_bytes):
    if num_nodes <= 8:
        return num_nodes
    cands = [t for t in (1024, 512, 256, 128, 64, 32, 16, 8) if t <= num_nodes]
    fitting = [t for t in cands
               if _vmem_bytes(t, num_nodes, h_pad, tf_itemsize, out_itemsize,
                              2, w_buffers) <= budget_bytes]
    if not fitting:
        return 8
    if num_nodes > 128:
        # Keep >=2 row tiles so the "parallel" axis can shard across v7x's
        # two TensorCores instead of idling one.
        multi = [t for t in fitting if num_nodes > t]
        if multi:
            return multi[0]
    return fitting[0]


def _supports_pipeline_mode():
    try:
        pl.BlockSpec((8, 128), lambda i: (i, 0), pipeline_mode=pl.Buffered(1))
        return True
    except Exception:
        return False


# -------------------------------- wrapper ------------------------------------
def topology_encoder_forward(traffic_flow, physical_adj, params, *, beta=0.5,
                             out_dtype=jnp.float32):
    """params: PyTorch Linear convention (w: [out, in], b: [out]).

    traffic_flow is streamed in whatever dtype it arrives in (upcast to f32
    inside the accumulate); pass bf16 to halve the dominant HBM stream.
    """
    batch, num_nodes, _ = traffic_flow.shape
    hidden_dim = params["w1"].shape[0]

    h_pad = _round_up(hidden_dim, 128)
    dh = h_pad - hidden_dim

    # ---- glue (all tiny): pad ONLY the hidden dim, transpose weights, bf16 --
    padj = jnp.asarray(physical_adj, jnp.float32)

    def prep_w(w, pad_in, pad_out):
        return jnp.pad(jnp.asarray(w, jnp.float32).T,
                       ((0, pad_in), (0, pad_out))).astype(jnp.bfloat16)

    def prep_b(bv, pad_out):
        return jnp.pad(jnp.asarray(bv, jnp.float32), (0, pad_out)).reshape(1, -1)

    w1 = prep_w(params["w1"], 0, dh)        # [N,     H_pad] bf16
    w2 = prep_w(params["w2"], dh, dh)       # [H_pad, H_pad] bf16
    w3 = prep_w(params["w3"], dh, dh)
    b1 = prep_b(params["b1"], dh)           # [1, H_pad] f32
    b2 = prep_b(params["b2"], dh)
    b3 = prep_b(params["b3"], dh)

    # ---- generation-aware VMEM budget / limit -------------------------------
    try:
        vmem_cap = int(pltpu.get_tpu_info().vmem_capacity_bytes)
    except Exception:
        vmem_cap = 64 * 1024 * 1024         # conservative (v7x) fallback
    budget = int(vmem_cap * 0.45)           # ~28 MiB on v7x, ~57 MiB on v5e/v6e
    vmem_limit = max(16 * 1024 * 1024,
                     min(int(vmem_cap * 0.70), vmem_cap - 8 * 1024 * 1024))

    tf_itemsize = jnp.dtype(traffic_flow.dtype).itemsize
    out_itemsize = jnp.dtype(out_dtype).itemsize

    has_pm = _supports_pipeline_mode()
    w_buffers = 1 if has_pm else 2          # single-buffer the resident weights
    tm = _pick_row_tile(num_nodes, h_pad, tf_itemsize, out_itemsize,
                        w_buffers, budget)
    tf_buffers = 2
    if has_pm and _vmem_bytes(tm, num_nodes, h_pad, tf_itemsize, out_itemsize,
                              3, w_buffers) <= budget:
        tf_buffers = 3                      # deeper buffering on the big stream

    grid = (pl.cdiv(num_nodes, tm), batch)
    kernel = functools.partial(_topology_encoder_kernel,
                               float(beta), 1.0 / float(batch))

    cost = pl.CostEstimate(
        flops=(batch * num_nodes * num_nodes
               + 2 * num_nodes * num_nodes * h_pad
               + 4 * num_nodes * h_pad * h_pad),
        transcendentals=4 * num_nodes * num_nodes,     # 2 sigmoids ~ exp + recip
        bytes_accessed=(batch * num_nodes * num_nodes * tf_itemsize
                        + num_nodes * num_nodes * 4
                        + (num_nodes * h_pad + 2 * h_pad * h_pad) * 2
                        + 3 * h_pad * 4
                        + num_nodes * h_pad * out_itemsize),
    )

    def _run(use_pm):
        def spec(shape, imap, buffers=None):
            if buffers is None or not use_pm:
                return pl.BlockSpec(shape, imap)
            return pl.BlockSpec(shape, imap, pipeline_mode=pl.Buffered(buffers))

        resident = lambda i, b: (0, 0)
        tf_pm = tf_buffers if tf_buffers != 2 else None
        in_specs = [
            spec((None, tm, num_nodes), lambda i, b: (b, i, 0), tf_pm),  # traffic slice
            pl.BlockSpec((tm, num_nodes), lambda i, b: (i, 0)),          # physical_adj rows
            spec((num_nodes, h_pad), resident, 1),                       # W1 (resident)
            spec((1, h_pad), resident, 1),                               # b1
            spec((h_pad, h_pad), resident, 1),                           # W2
            spec((1, h_pad), resident, 1),                               # b2
            spec((h_pad, h_pad), resident, 1),                           # W3
            spec((1, h_pad), resident, 1),                               # b3
        ]
        out_spec = pl.BlockSpec((tm, h_pad), lambda i, b: (i, 0))

        fn = pl.pallas_call(
            kernel,
            out_shape=jax.ShapeDtypeStruct((num_nodes, h_pad), out_dtype),
            grid=grid,
            in_specs=in_specs,
            out_specs=out_spec,
            scratch_shapes=[pltpu.VMEM((tm, num_nodes), jnp.float32),   # mean acc
                            pltpu.VMEM((tm, num_nodes), jnp.float32)],  # sigmoid(padj)
            compiler_params=pltpu.CompilerParams(
                dimension_semantics=("parallel", "arbitrary"),
                vmem_limit_bytes=int(vmem_limit)),
            cost_estimate=cost,
        )
        return fn(traffic_flow, padj, w1, b1, w2, b2, w3, b3)

    if has_pm:
        try:
            out_padded = jax.block_until_ready(_run(True))
        except Exception:
            # best-effort: retry with default double-buffering everywhere
            out_padded = _run(False)
    else:
        out_padded = _run(False)

    return out_padded[:, :hidden_dim]


# ------------------------------- references ---------------------------------
def _reference_f32(traffic_flow, physical_adj, params, beta=0.5):
    traffic_adj = jnp.mean(traffic_flow, axis=0)
    adj = jax.nn.sigmoid(physical_adj) + beta * jax.nn.sigmoid(traffic_adj)
    x = adj
    for w, b in ((params["w1"], params["b1"]),
                 (params["w2"], params["b2"]),
                 (params["w3"], params["b3"])):
        x = jnp.maximum(x @ w.T + b, 0.0)
    return x


def _reference_bf16(traffic_flow, physical_adj, params, beta=0.5):
    # mirrors the kernel's bf16-input / f32-accumulate matmuls
    traffic_adj = jnp.mean(traffic_flow, axis=0)
    adj = jax.nn.sigmoid(physical_adj) + beta * jax.nn.sigmoid(traffic_adj)
    x = adj
    for w, b in ((params["w1"], params["b1"]),
                 (params["w2"], params["b2"]),
                 (params["w3"], params["b3"])):
        xw = jnp.dot(x.astype(jnp.bfloat16), w.T.astype(jnp.bfloat16),
                     preferred_element_type=jnp.float32)
        x = jnp.maximum(xw + b, 0.0)
    return x


if __name__ == "__main__":
    batch, num_nodes, hidden_dim = 2, 16, 32
    beta = 0.5

    key = jax.random.PRNGKey(0)
    k_tf, k_padj, k_w1, k_b1, k_w2, k_b2, k_w3, k_b3 = jax.random.split(key, 8)

    # Inputs
    traffic_flow = jax.random.normal(k_tf, (batch, num_nodes, num_nodes),
                                     dtype=jnp.float32)

    # Parameters (deterministic, PyTorch-shaped):
    #   physical_adj ~ randn(N, N)
    #   Linear(in, out): w [out, in] ~ U(-1/sqrt(in), 1/sqrt(in)), b [out]
    physical_adj = jax.random.normal(k_padj, (num_nodes, num_nodes),
                                     dtype=jnp.float32)

    def linear_init(kw, kb, in_f, out_f):
        bound = 1.0 / (in_f ** 0.5)
        w = jax.random.uniform(kw, (out_f, in_f), jnp.float32, -bound, bound)
        b = jax.random.uniform(kb, (out_f,), jnp.float32, -bound, bound)
        return w, b

    w1, b1 = linear_init(k_w1, k_b1, num_nodes, hidden_dim)
    w2, b2 = linear_init(k_w2, k_b2, hidden_dim, hidden_dim)
    w3, b3 = linear_init(k_w3, k_b3, hidden_dim, hidden_dim)
    params = dict(w1=w1, b1=b1, w2=w2, b2=b2, w3=w3, b3=b3)

    out = topology_encoder_forward(traffic_flow, physical_adj, params, beta=beta)
    out = jax.block_until_ready(out)
    assert out.shape == (num_nodes, hidden_dim)

    # Tight check against a reference using the same bf16-in / f32-acc matmuls.
    ref16 = _reference_bf16(traffic_flow, physical_adj, params, beta=beta)
    assert jnp.allclose(out, ref16, atol=1e-2, rtol=1e-2), "mismatch vs bf16 reference"

    # Loose sanity check against the pure-f32 reference.
    ref32 = _reference_f32(traffic_flow, physical_adj, params, beta=beta)
    assert jnp.allclose(out, ref32, atol=1e-1, rtol=1e-1), "mismatch vs f32 reference"

    print("KERNEL_OK")
</pallas_src>

<mosaic_0001>
module attributes {stable_mosaic.version = 11 : i64} {
  func.func @_topology_encoder_kernel(%arg0: i32, %arg1: i32, %arg2: memref<1x16x16xf32, #tpu.memory_space<vmem>>, %arg3: memref<16x16xf32, #tpu.memory_space<vmem>>, %arg4: memref<16x128xbf16, #tpu.memory_space<vmem>>, %arg5: memref<1x128xf32, #tpu.memory_space<vmem>>, %arg6: memref<128x128xbf16, #tpu.memory_space<vmem>>, %arg7: memref<1x128xf32, #tpu.memory_space<vmem>>, %arg8: memref<128x128xbf16, #tpu.memory_space<vmem>>, %arg9: memref<1x128xf32, #tpu.memory_space<vmem>>, %arg10: memref<16x128xf32, #tpu.memory_space<vmem>>, %arg11: memref<16x16xf32, #tpu.memory_space<vmem>>, %arg12: memref<16x16xf32, #tpu.memory_space<vmem>>) attributes {dimension_semantics = [#tpu.dimension_semantics<parallel>, #tpu.dimension_semantics<arbitrary>], iteration_bounds = array<i64: 1, 2>, scalar_prefetch = 0 : i64, scratch_operands = 2 : i64, tpu.core_type = #tpu.core_type<tc>, window_params = [{transform_indices = @transform_0, window_bounds = array<i64: 1, 16, 16>}, {transform_indices = @transform_1, window_bounds = array<i64: 16, 16>}, {pipeline_mode = #tpu.pipeline_mode<synchronous>, transform_indices = @transform_2, window_bounds = array<i64: 16, 128>}, {pipeline_mode = #tpu.pipeline_mode<synchronous>, transform_indices = @transform_3, window_bounds = array<i64: 1, 128>}, {pipeline_mode = #tpu.pipeline_mode<synchronous>, transform_indices = @transform_4, window_bounds = array<i64: 128, 128>}, {pipeline_mode = #tpu.pipeline_mode<synchronous>, transform_indices = @transform_5, window_bounds = array<i64: 1, 128>}, {pipeline_mode = #tpu.pipeline_mode<synchronous>, transform_indices = @transform_6, window_bounds = array<i64: 128, 128>}, {pipeline_mode = #tpu.pipeline_mode<synchronous>, transform_indices = @transform_7, window_bounds = array<i64: 1, 128>}, {transform_indices = @transform_8, window_bounds = array<i64: 16, 128>}]} {
    %c0_i32 = arith.constant 0 : i32
    %0 = arith.cmpi eq, %arg1, %c0_i32 : i32
    %1 = arith.extui %0 : i1 to i32
    %c0_i32_0 = arith.constant 0 : i32
    %2 = arith.cmpi ne, %1, %c0_i32_0 : i32
    scf.if %2 {
      %cst = arith.constant 0.000000e+00 : f32
      %11 = vector.broadcast %cst : f32 to vector<16x16xf32>
      %c0_8 = arith.constant 0 : index
      %c0_9 = arith.constant 0 : index
      %12 = vector.load %arg11[%c0_8, %c0_9] : memref<16x16xf32, #tpu.memory_space<vmem>>, vector<16x16xf32>
      tpu.vector_store %arg11[%c0_8, %c0_9], %11 {strides = array<i32>} : memref<16x16xf32, #tpu.memory_space<vmem>>, vector<16x16xf32>,
      %c0_10 = arith.constant 0 : index
      %c0_11 = arith.constant 0 : index
      %13 = vector.load %arg3[%c0_10, %c0_11] : memref<16x16xf32, #tpu.memory_space<vmem>>, vector<16x16xf32>
      %14 = arith.negf %13 : vector<16x16xf32>
      %15 = math.exp %14 : vector<16x16xf32>
      %cst_12 = arith.constant 1.000000e+00 : f32
      %16 = vector.broadcast %cst_12 : f32 to vector<16x16xf32>
      %17 = arith.addf %16, %15 : vector<16x16xf32>
      %18 = arith.divf %16, %17 : vector<16x16xf32>
      %c0_13 = arith.constant 0 : index
      %c0_14 = arith.constant 0 : index
      %19 = vector.load %arg12[%c0_13, %c0_14] : memref<16x16xf32, #tpu.memory_space<vmem>>, vector<16x16xf32>
      tpu.vector_store %arg12[%c0_13, %c0_14], %18 {strides = array<i32>} : memref<16x16xf32, #tpu.memory_space<vmem>>, vector<16x16xf32>,
    } else {
    }
    %c0 = arith.constant 0 : index
    %c0_1 = arith.constant 0 : index
    %3 = vector.load %arg11[%c0, %c0_1] : memref<16x16xf32, #tpu.memory_space<vmem>>, vector<16x16xf32>
    %c0_2 = arith.constant 0 : index
    %c0_3 = arith.constant 0 : index
    %c0_4 = arith.constant 0 : index
    %4 = vector.load %arg2[%c0_2, %c0_3, %c0_4] : memref<1x16x16xf32, #tpu.memory_space<vmem>>, vector<1x16x16xf32>
    %5 = vector.shape_cast %4 : vector<1x16x16xf32> to vector<16x16xf32>
    %6 = arith.addf %3, %5 : vector<16x16xf32>
    %c0_5 = arith.constant 0 : index
    %c0_6 = arith.constant 0 : index
    %7 = vector.load %arg11[%c0_5, %c0_6] : memref<16x16xf32, #tpu.memory_space<vmem>>, vector<16x16xf32>
    tpu.vector_store %arg11[%c0_5, %c0_6], %6 {strides = array<i32>} : memref<16x16xf32, #tpu.memory_space<vmem>>, vector<16x16xf32>,
    %c1_i32 = arith.constant 1 : i32
    %8 = arith.cmpi eq, %arg1, %c1_i32 : i32
    %9 = arith.extui %8 : i1 to i32
    %c0_i32_7 = arith.constant 0 : i32
    %10 = arith.cmpi ne, %9, %c0_i32_7 : i32
    scf.if %10 {
      %c0_8 = arith.constant 0 : index
      %c0_9 = arith.constant 0 : index
      %11 = vector.load %arg11[%c0_8, %c0_9] : memref<16x16xf32, #tpu.memory_space<vmem>>, vector<16x16xf32>
      %cst = arith.constant 5.000000e-01 : f32
      %12 = vector.broadcast %cst : f32 to vector<16x16xf32>
      %13 = arith.mulf %11, %12 : vector<16x16xf32>
      %c0_10 = arith.constant 0 : index
      %c0_11 = arith.constant 0 : index
      %14 = vector.load %arg12[%c0_10, %c0_11] : memref<16x16xf32, #tpu.memory_space<vmem>>, vector<16x16xf32>
      %15 = arith.negf %13 : vector<16x16xf32>
      %16 = math.exp %15 : vector<16x16xf32>
      %cst_12 = arith.constant 1.000000e+00 : f32
      %17 = vector.broadcast %cst_12 : f32 to vector<16x16xf32>
      %18 = arith.addf %17, %16 : vector<16x16xf32>
      %19 = arith.divf %17, %18 : vector<16x16xf32>
      %cst_13 = arith.constant 5.000000e-01 : f32
      %20 = vector.broadcast %cst_13 : f32 to vector<16x16xf32>
      %21 = arith.mulf %20, %19 : vector<16x16xf32>
      %22 = arith.addf %14, %21 : vector<16x16xf32>
      %23 = arith.truncf %22 : vector<16x16xf32> to vector<16x16xbf16>
      %c0_14 = arith.constant 0 : index
      %c0_15 = arith.constant 0 : index
      %24 = vector.load %arg4[%c0_14, %c0_15] : memref<16x128xbf16, #tpu.memory_space<vmem>>, vector<16x128xbf16>
      %cst_16 = arith.constant dense<0.000000e+00> : vector<16x128xf32>
      %25 = tpu.matmul %23, %24, %cst_16 {dimension_numbers = #tpu.dot_dimension_numbers<[1], [0], [0], [1], [0, 0, 1, 1], [], []>} : vector<16x16xbf16>, vector<16x128xbf16>, vector<16x128xf32> -> vector<16x128xf32>
      %c0_17 = arith.constant 0 : index
      %c0_18 = arith.constant 0 : index
      %26 = vector.load %arg5[%c0_17, %c0_18] : memref<1x128xf32, #tpu.memory_space<vmem>>, vector<1x128xf32>
      %27 = vector.broadcast %26 : vector<1x128xf32> to vector<16x128xf32>
      %28 = arith.addf %25, %27 : vector<16x128xf32>
      %cst_19 = arith.constant 0.000000e+00 : f32
      %29 = vector.broadcast %cst_19 : f32 to vector<16x128xf32>
      %30 = arith.maximumf %28, %29 : vector<16x128xf32>
      %31 = arith.truncf %30 : vector<16x128xf32> to vector<16x128xbf16>
      %c0_20 = arith.constant 0 : index
      %c0_21 = arith.constant 0 : index
      %32 = vector.load %arg6[%c0_20, %c0_21] : memref<128x128xbf16, #tpu.memory_space<vmem>>, vector<128x128xbf16>
      %cst_22 = arith.constant dense<0.000000e+00> : vector<16x128xf32>
      %33 = tpu.matmul %31, %32, %cst_22 {dimension_numbers = #tpu.dot_dimension_numbers<[1], [0], [0], [1], [0, 0, 1, 1], [], []>} : vector<16x128xbf16>, vector<128x128xbf16>, vector<16x128xf32> -> vector<16x128xf32>
      %c0_23 = arith.constant 0 : index
      %c0_24 = arith.constant 0 : index
      %34 = vector.load %arg7[%c0_23, %c0_24] : memref<1x128xf32, #tpu.memory_space<vmem>>, vector<1x128xf32>
      %35 = vector.broadcast %34 : vector<1x128xf32> to vector<16x128xf32>
      %36 = arith.addf %33, %35 : vector<16x128xf32>
      %cst_25 = arith.constant 0.000000e+00 : f32
      %37 = vector.broadcast %cst_25 : f32 to vector<16x128xf32>
      %38 = arith.maximumf %36, %37 : vector<16x128xf32>
      %39 = arith.truncf %38 : vector<16x128xf32> to vector<16x128xbf16>
      %c0_26 = arith.constant 0 : index
      %c0_27 = arith.constant 0 : index
      %40 = vector.load %arg8[%c0_26, %c0_27] : memref<128x128xbf16, #tpu.memory_space<vmem>>, vector<128x128xbf16>
      %cst_28 = arith.constant dense<0.000000e+00> : vector<16x128xf32>
      %41 = tpu.matmul %39, %40, %cst_28 {dimension_numbers = #tpu.dot_dimension_numbers<[1], [0], [0], [1], [0, 0, 1, 1], [], []>} : vector<16x128xbf16>, vector<128x128xbf16>, vector<16x128xf32> -> vector<16x128xf32>
      %c0_29 = arith.constant 0 : index
      %c0_30 = arith.constant 0 : index
      %42 = vector.load %arg9[%c0_29, %c0_30] : memref<1x128xf32, #tpu.memory_space<vmem>>, vector<1x128xf32>
      %43 = vector.broadcast %42 : vector<1x128xf32> to vector<16x128xf32>
      %44 = arith.addf %41, %43 : vector<16x128xf32>
      %cst_31 = arith.constant 0.000000e+00 : f32
      %45 = vector.broadcast %cst_31 : f32 to vector<16x128xf32>
      %46 = arith.maximumf %44, %45 : vector<16x128xf32>
      %c0_32 = arith.constant 0 : index
      %c0_33 = arith.constant 0 : index
      %47 = vector.load %arg10[%c0_32, %c0_33] : memref<16x128xf32, #tpu.memory_space<vmem>>, vector<16x128xf32>
      tpu.vector_store %arg10[%c0_32, %c0_33], %46 {strides = array<i32>} : memref<16x128xf32, #tpu.memory_space<vmem>>, vector<16x128xf32>,
    } else {
    }
    return
  }
  func.func @transform_0(%arg0: i32, %arg1: i32) -> (i32, i32, i32) {
    %c0_i32 = arith.constant 0 : i32
    %c0_i32_0 = arith.constant 0 : i32
    return %arg1, %arg0, %c0_i32 : i32, i32, i32
  }
  func.func @transform_1(%arg0: i32, %arg1: i32) -> (i32, i32) {
    %c0_i32 = arith.constant 0 : i32
    %c0_i32_0 = arith.constant 0 : i32
    return %arg0, %c0_i32 : i32, i32
  }
  func.func @transform_2(%arg0: i32, %arg1: i32) -> (i32, i32) {
    %c0_i32 = arith.constant 0 : i32
    %c0_i32_0 = arith.constant 0 : i32
    %c0_i32_1 = arith.constant 0 : i32
    return %c0_i32, %c0_i32_0 : i32, i32
  }
  func.func @transform_3(%arg0: i32, %arg1: i32) -> (i32, i32) {
    %c0_i32 = arith.constant 0 : i32
    %c0_i32_0 = arith.constant 0 : i32
    %c0_i32_1 = arith.constant 0 : i32
    return %c0_i32, %c0_i32_0 : i32, i32
  }
  func.func @transform_4(%arg0: i32, %arg1: i32) -> (i32, i32) {
    %c0_i32 = arith.constant 0 : i32
    %c0_i32_0 = arith.constant 0 : i32
    %c0_i32_1 = arith.constant 0 : i32
    return %c0_i32, %c0_i32_0 : i32, i32
  }
  func.func @transform_5(%arg0: i32, %arg1: i32) -> (i32, i32) {
    %c0_i32 = arith.constant 0 : i32
    %c0_i32_0 = arith.constant 0 : i32
    %c0_i32_1 = arith.constant 0 : i32
    return %c0_i32, %c0_i32_0 : i32, i32
  }
  func.func @transform_6(%arg0: i32, %arg1: i32) -> (i32, i32) {
    %c0_i32 = arith.constant 0 : i32
    %c0_i32_0 = arith.constant 0 : i32
    %c0_i32_1 = arith.constant 0 : i32
    return %c0_i32, %c0_i32_0 : i32, i32
  }
  func.func @transform_7(%arg0: i32, %arg1: i32) -> (i32, i32) {
    %c0_i32 = arith.constant 0 : i32
    %c0_i32_0 = arith.constant 0 : i32
    %c0_i32_1 = arith.constant 0 : i32
    return %c0_i32, %c0_i32_0 : i32, i32
  }
  func.func @transform_8(%arg0: i32, %arg1: i32) -> (i32, i32) {
    %c0_i32 = arith.constant 0 : i32
    %c0_i32_0 = arith.constant 0 : i32
    return %arg0, %c0_i32 : i32, i32
  }
}

</mosaic_0001>

<llo_original>
// kernel: tpu_custom_call.1
$region0: #{tpu_custom_call.1}
  #allocation0 [shape = 'u32[]', space=smem, size = 0x4, offset = 0x4, fixed_abs, tag = 'smem constant byte address 0x4 - core index']
  #allocation1 [shape = 'u32[72,128]{1,0:T(1,128)}', space=vmem, size = 0x9000, scoped, tag = 'internal scratch']
  #allocation2 [shape = 'f32[16,16]{1,0:T(8,128)}', space=vmem, size = 0x2000, scoped, tag = 'scratch operand']
  #allocation3 [shape = 'f32[16,16]{1,0:T(8,128)}', space=vmem, size = 0x2000, scoped, tag = 'scratch operand']
  %s0 = inlined_call_operand.hbm [shape: f32[2,16,16], index: 0, kind: input, shape index: {}]
  %s1 = inlined_call_operand.hbm [shape: f32[16,16], index: 1, kind: input, shape index: {}]
  %s2 = inlined_call_operand.hbm [shape: bf16[16,128], index: 2, kind: input, shape index: {}]
  %s3 = inlined_call_operand.vmem [shape: f32[1,128], index: 3, kind: input, shape index: {}]
  %s4 = inlined_call_operand.hbm [shape: bf16[128,128], index: 4, kind: input, shape index: {}]
  %s5 = inlined_call_operand.vmem [shape: f32[1,128], index: 5, kind: input, shape index: {}]
  %s6 = inlined_call_operand.hbm [shape: bf16[128,128], index: 6, kind: input, shape index: {}]
  %s7 = inlined_call_operand.vmem [shape: f32[1,128], index: 7, kind: input, shape index: {}]
  %s8 = inlined_call_operand.hbm [shape: f32[16,128], index: 8, kind: output, shape index: {}]
  %s9 = sld [smem:[#allocation0]]
  $region93: #{tpu_custom_call.1} parent=0
    _
  %s11 = ssub.s32 1, %s9
  %s12 = scalar_select 0, %s11, %s9
  $region1: #{tpu_custom_call.1} parent=0
    #allocation4 [shape = 'u8[16384]{0}', space=vmem, size = 0x4000, scoped, tag = 'input window, operand 0']
    #allocation5 [shape = 's32[2]{0}', space=sflag, size = 0x8, scoped, tag = 'scoped memory for tpu_custom_call.1']
    #allocation6 [shape = 's32[2]{0}', space=sflag, size = 0x8, scoped, tag = 'scoped memory for tpu_custom_call.1']
    #allocation7 [shape = 'u8[8192]{0}', space=vmem, size = 0x2000, scoped, tag = 'input window, operand 1, single buffered']
    #allocation8 [shape = 's32[1]{0}', space=sflag, size = 0x4, scoped, tag = 'scoped memory for tpu_custom_call.1']
    #allocation9 [shape = 'u8[4096]{0}', space=vmem, size = 0x1000, scoped, tag = 'input window, operand 2, single buffered']
    #allocation10 [shape = 'u8[32768]{0}', space=vmem, size = 0x8000, scoped, tag = 'input window, operand 4, single buffered']
    #allocation11 [shape = 's32[1]{0}', space=sflag, size = 0x4, scoped, tag = 'scoped memory for tpu_custom_call.1']
    #allocation12 [shape = 'u8[32768]{0}', space=vmem, size = 0x8000, scoped, tag = 'input window, operand 6, single buffered']
    #allocation13 [shape = 'u8[8192]{0}', space=vmem, size = 0x2000, scoped, tag = 'output window, operand 0, single buffered']
    %13 = vsyncpa [#allocation5], 0
    %s14 = scalar_lea.sflag [#allocation5], 1
    %15 = vsyncpa %s14, 0
    %16 = vsyncpa [#allocation8], 0
    %17 = vsyncpa [#allocation11], 0
    %18 = vsyncpa [#allocation6], 0
    loop: start=0, step=1, limit=4
    $region2: #{tpu_custom_call.1} parent=1 // loop_pre_header
      _
    $region3: #{tpu_custom_call.1} parent=1 // loop_header
      %s20 = sphi 0, %s24
      %p21 = scmp.ge.s32.totalorder %s20, 4
      %s27 = sphi 0, %s39
      %s28 = sphi 0, %s35
      %s29 = sphi 0, %s27
      %s30 = sphi 0, %s28
      %s31 = sphi 0, %s29
      %s32 = sphi 0, %s30
      %s44 = sphi 0, %s46
      %s47 = sphi 0, %s44
      %s48 = sphi 0, %s47
      %s64 = sphi 0, %s48
      %s70 = sphi 0, %s72
      %s73 = sphi 0, %s70
      %s74 = sphi 0, %s73
      %s90 = sphi 0, %s74
      %s94 = sphi 0, %s94
      %s96 = sphi 0, %s94
      %s97 = sphi 0, %s96
      %s111 = sphi 0, %s97
      %s115 = sphi 0, %s115
      %s117 = sphi 0, %s115
      %s118 = sphi 0, %s117
      %s132 = sphi 0, %s118
      %s136 = sphi 0, %s136
      %s138 = sphi 0, %s136
      %s139 = sphi 0, %s138
      %s153 = sphi 0, %s139
      %s157 = sphi 0, %s157
      %s159 = sphi 0, %s157
      %s160 = sphi 0, %s159
      %s174 = sphi 0, %s160
      %s178 = sphi 0, %s178
      %s180 = sphi 0, %s178
      %s181 = sphi 0, %s180
      %s195 = sphi 0, %s181
      %s199 = sphi 0, %s199
      %s201 = sphi 0, %s199
      %s202 = sphi 0, %s201
      %s216 = sphi 0, %s202
      %s222 = sphi 0, %s224
      %s225 = sphi 0, %s222
      %s226 = sphi 0, %s225
      %s242 = sphi 0, %s226
    $region4: #{tpu_custom_call.1} parent=1 // loop_header_branch
      %23 = sbr.rel (%p21) target = $region8
    $region5: #{tpu_custom_call.1} parent=1 // loop_body
      %s25 = ssub.s32 %s20, 1
      %s26 = ssub.s32 %s20, 2
      %s33 = sadd.s32 1, %s28
      %p34 = scmp.ge.s32.totalorder %s33, 2
      %s35 = scalar_select %p34, 0, %s33
      %s36 = sadd.s32 1, %s27
      %s37 = scalar_select %p34, %s36, %s27
      %p38 = scmp.ge.s32.totalorder %s37, 1
      %s39 = scalar_select %p38, 0, %s37
      %s40 = ssub.s32 %s28, %s35
      %s41 = ssub.s32 %s27, %s39
      %s42 = sor.u32 %s40, %s41
      %p43 = scmp.eq.s32.totalorder %s42, 0
      %s45 = sadd.s32 %s44, 1
      %s46 = scalar_select %p43, %s44, %s45
      %p49 = pneg %p43
      %p50 = scmp.eq.s32.totalorder %s20, 1
      %p51 = por %p49, %p50
      %p52 = scmp.ne.s32.totalorder %s44, %s47
      %p53 = scmp.eq.s32.totalorder %s20, 0
      %p54 = por %p52, %p53
      %p55 = scmp.ne.s32.totalorder %s44, %s47
      %p56 = scmp.eq.s32.totalorder %s25, 1
      %p57 = por %p55, %p56
      %p58 = scmp.ne.s32.totalorder %s47, %s48
      %p59 = scmp.eq.s32.totalorder %s25, 0
      %p60 = por %p58, %p59
      %p61 = scmp.ne.s32.totalorder %s47, %s48
      %p62 = scmp.eq.s32.totalorder %s26, 1
      %p63 = por %p61, %p62
      %p65 = scmp.ne.s32.totalorder %s48, %s64
      %p66 = scmp.eq.s32.totalorder %s26, 0
      %p67 = por %p65, %p66
      %s68 = ssub.s32 %s27, %s39
      %p69 = scmp.eq.s32.totalorder %s68, 0
      %s71 = sadd.s32 %s70, 1
      %s72 = scalar_select %p69, %s70, %s71
      %p75 = pneg %p69
      %p76 = scmp.eq.s32.totalorder %s20, 1
      %p77 = por %p75, %p76
      %p78 = scmp.ne.s32.totalorder %s70, %s73
      %p79 = scmp.eq.s32.totalorder %s20, 0
      %p80 = por %p78, %p79
      %p81 = scmp.ne.s32.totalorder %s70, %s73
      %p82 = scmp.eq.s32.totalorder %s25, 1
      %p83 = por %p81, %p82
      %p84 = scmp.ne.s32.totalorder %s73, %s74
      %p85 = scmp.eq.s32.totalorder %s25, 0
      %p86 = por %p84, %p85
      %p87 = scmp.ne.s32.totalorder %s73, %s74
      %p88 = scmp.eq.s32.totalorder %s26, 1
      %p89 = por %p87, %p88
      %p91 = scmp.ne.s32.totalorder %s74, %s90
      %p92 = scmp.eq.s32.totalorder %s26, 0
      %p93 = por %p91, %p92
      %s95 = sadd.s32 %s94, 1
      %p98 = scmp.eq.s32.totalorder %s20, 1
      %p99 = scmp.ne.s32.totalorder %s94, %s96
      %p100 = scmp.eq.s32.totalorder %s20, 0
      %p101 = por %p99, %p100
      %p102 = scmp.ne.s32.totalorder %s94, %s96
      %p103 = scmp.eq.s32.totalorder %s25, 1
      %p104 = por %p102, %p103
      %p105 = scmp.ne.s32.totalorder %s96, %s97
      %p106 = scmp.eq.s32.totalorder %s25, 0
      %p107 = por %p105, %p106
      %p108 = scmp.ne.s32.totalorder %s96, %s97
      %p109 = scmp.eq.s32.totalorder %s26, 1
      %p110 = por %p108, %p109
      %p112 = scmp.ne.s32.totalorder %s97, %s111
      %p113 = scmp.eq.s32.totalorder %s26, 0
      %p114 = por %p112, %p113
      %s116 = sadd.s32 %s115, 1
      %p119 = scmp.eq.s32.totalorder %s20, 1
      %p120 = scmp.ne.s32.totalorder %s115, %s117
      %p121 = scmp.eq.s32.totalorder %s20, 0
      %p122 = por %p120, %p121
      %p123 = scmp.ne.s32.totalorder %s115, %s117
      %p124 = scmp.eq.s32.totalorder %s25, 1
      %p125 = por %p123, %p124
      %p126 = scmp.ne.s32.totalorder %s117, %s118
      %p127 = scmp.eq.s32.totalorder %s25, 0
      %p128 = por %p126, %p127
      %p129 = scmp.ne.s32.totalorder %s117, %s118
      %p130 = scmp.eq.s32.totalorder %s26, 1
      %p131 = por %p129, %p130
      %p133 = scmp.ne.s32.totalorder %s118, %s132
      %p134 = scmp.eq.s32.totalorder %s26, 0
      %p135 = por %p133, %p134
      %s137 = sadd.s32 %s136, 1
      %p140 = scmp.eq.s32.totalorder %s20, 1
      %p141 = scmp.ne.s32.totalorder %s136, %s138
      %p142 = scmp.eq.s32.totalorder %s20, 0
      %p143 = por %p141, %p142
      %p144 = scmp.ne.s32.totalorder %s136, %s138
      %p145 = scmp.eq.s32.totalorder %s25, 1
      %p146 = por %p144, %p145
      %p147 = scmp.ne.s32.totalorder %s138, %s139
      %p148 = scmp.eq.s32.totalorder %s25, 0
      %p149 = por %p147, %p148
      %p150 = scmp.ne.s32.totalorder %s138, %s139
      %p151 = scmp.eq.s32.totalorder %s26, 1
      %p152 = por %p150, %p151
      %p154 = scmp.ne.s32.totalorder %s139, %s153
      %p155 = scmp.eq.s32.totalorder %s26, 0
      %p156 = por %p154, %p155
      %s158 = sadd.s32 %s157, 1
      %p161 = scmp.eq.s32.totalorder %s20, 1
      %p162 = scmp.ne.s32.totalorder %s157, %s159
      %p163 = scmp.eq.s32.totalorder %s20, 0
      %p164 = por %p162, %p163
      %p165 = scmp.ne.s32.totalorder %s157, %s159
      %p166 = scmp.eq.s32.totalorder %s25, 1
      %p167 = por %p165, %p166
      %p168 = scmp.ne.s32.totalorder %s159, %s160
      %p169 = scmp.eq.s32.totalorder %s25, 0
      %p170 = por %p168, %p169
      %p171 = scmp.ne.s32.totalorder %s159, %s160
      %p172 = scmp.eq.s32.totalorder %s26, 1
      %p173 = por %p171, %p172
      %p175 = scmp.ne.s32.totalorder %s160, %s174
      %p176 = scmp.eq.s32.totalorder %s26, 0
      %p177 = por %p175, %p176
      %s179 = sadd.s32 %s178, 1
      %p182 = scmp.eq.s32.totalorder %s20, 1
      %p183 = scmp.ne.s32.totalorder %s178, %s180
      %p184 = scmp.eq.s32.totalorder %s20, 0
      %p185 = por %p183, %p184
      %p186 = scmp.ne.s32.totalorder %s178, %s180
      %p187 = scmp.eq.s32.totalorder %s25, 1
      %p188 = por %p186, %p187
      %p189 = scmp.ne.s32.totalorder %s180, %s181
      %p190 = scmp.eq.s32.totalorder %s25, 0
      %p191 = por %p189, %p190
      %p192 = scmp.ne.s32.totalorder %s180, %s181
      %p193 = scmp.eq.s32.totalorder %s26, 1
      %p194 = por %p192, %p193
      %p196 = scmp.ne.s32.totalorder %s181, %s195
      %p197 = scmp.eq.s32.totalorder %s26, 0
      %p198 = por %p196, %p197
      %s200 = sadd.s32 %s199, 1
      %p203 = scmp.eq.s32.totalorder %s20, 1
      %p204 = scmp.ne.s32.totalorder %s199, %s201
      %p205 = scmp.eq.s32.totalorder %s20, 0
      %p206 = por %p204, %p205
      %p207 = scmp.ne.s32.totalorder %s199, %s201
      %p208 = scmp.eq.s32.totalorder %s25, 1
      %p209 = por %p207, %p208
      %p210 = scmp.ne.s32.totalorder %s201, %s202
      %p211 = scmp.eq.s32.totalorder %s25, 0
      %p212 = por %p210, %p211
      %p213 = scmp.ne.s32.totalorder %s201, %s202
      %p214 = scmp.eq.s32.totalorder %s26, 1
      %p215 = por %p213, %p214
      %p217 = scmp.ne.s32.totalorder %s202, %s216
      %p218 = scmp.eq.s32.totalorder %s26, 0
      %p219 = por %p217, %p218
      %s220 = ssub.s32 %s27, %s39
      %p221 = scmp.eq.s32.totalorder %s220, 0
      %s223 = sadd.s32 %s222, 1
      %s224 = scalar_select %p221, %s222, %s223
      %p227 = pneg %p221
      %p228 = scmp.eq.s32.totalorder %s20, 1
      %p229 = por %p227, %p228
      %p230 = scmp.ne.s32.totalorder %s222, %s225
      %p231 = scmp.eq.s32.totalorder %s20, 0
      %p232 = por %p230, %p231
      %p233 = scmp.ne.s32.totalorder %s222, %s225
      %p234 = scmp.eq.s32.totalorder %s25, 1
      %p235 = por %p233, %p234
      %p236 = scmp.ne.s32.totalorder %s225, %s226
      %p237 = scmp.eq.s32.totalorder %s25, 0
      %p238 = por %p236, %p237
      %p239 = scmp.ne.s32.totalorder %s225, %s226
      %p240 = scmp.eq.s32.totalorder %s26, 1
      %p241 = por %p239, %p240
      %p243 = scmp.ne.s32.totalorder %s226, %s242
      %p244 = scmp.eq.s32.totalorder %s26, 0
      %p245 = por %p243, %p244
      %p246 = scmp.le.s32.totalorder 1, %s20
      %p247 = scmp.lt.s32.totalorder %s20, 3
      %p248 = pnand %p246, %p247
      %p249 = pneg %p248
      // Predicated region
      $region9: #{tpu_custom_call.1} parent=5 // pred_check
        _
      $region10: #{tpu_custom_call.1} parent=5 // pred_check_branch
        %251 = sbr.rel (%p248) target = $region12
      $region11: #{tpu_custom_call.1} parent=5 // pred_region
        %s252 = ssub.s32 %s20, 1
        // Predicated region
        $region13: #{tpu_custom_call.1} parent=11 // pred_check
          %p253 = pneg %p86
        $region14: #{tpu_custom_call.1} parent=11 // pred_check_branch
          %255 = sbr.rel (%p253) target = $region16
        $region15: #{tpu_custom_call.1} parent=11 // pred_region
          %s256 = smul.u32 2, %s29
          %258 = vsyncadd [#allocation8], 0
          %s259 = smul.addr %s256, 8
          %s260 = scalar_lea.hbm %s1, %s259
          %s261 = sshll.u32 %s260, 4
          %s262 = int_to_ptr.hbm [resolvable:$true] %s261
          %s263 = sshll.u32 [#allocation7], 4
          %s264 = int_to_ptr.vmem [resolvable:$true] %s263
          %269 = dma.hbm_to_vmem [thread:$0]  %s262, 256, %s264, [#allocation8], 128, 128, 8
        $region16: #{tpu_custom_call.1} parent=11 // pred_fallthru
          _
        // Predicated region
        $region17: #{tpu_custom_call.1} parent=11 // pred_check
          %p270 = pneg %p107
        $region18: #{tpu_custom_call.1} parent=11 // pred_check_branch
          %272 = sbr.rel (%p270) target = $region20
        $region19: #{tpu_custom_call.1} parent=11 // pred_region
          %274 = vsyncadd [#allocation8], 0
          %s275 = sshll.u32 %s2, 4
          %s276 = int_to_ptr.hbm [resolvable:$true] %s275
          %s277 = sshll.u32 [#allocation9], 4
          %s278 = int_to_ptr.vmem [resolvable:$true] %s277
          %283 = dma.hbm_to_vmem [thread:$0]  %s276, 128, %s278, [#allocation8], 64, 64, 4
        $region20: #{tpu_custom_call.1} parent=11 // pred_fallthru
          _
        // Predicated region
        $region21: #{tpu_custom_call.1} parent=11 // pred_check
          %p284 = pneg %p128
        $region22: #{tpu_custom_call.1} parent=11 // pred_check_branch
          %286 = sbr.rel (%p284) target = $region24
        $region23: #{tpu_custom_call.1} parent=11 // pred_region
          _
        $region24: #{tpu_custom_call.1} parent=11 // pred_fallthru
          _
        // Predicated region
        $region25: #{tpu_custom_call.1} parent=11 // pred_check
          %p287 = pneg %p149
        $region26: #{tpu_custom_call.1} parent=11 // pred_check_branch
          %289 = sbr.rel (%p287) target = $region28
        $region27: #{tpu_custom_call.1} parent=11 // pred_region
          %291 = vsyncadd [#allocation11], 0
          %s292 = sshll.u32 %s4, 4
          %s293 = int_to_ptr.hbm [resolvable:$true] %s292
          %s294 = sshll.u32 [#allocation10], 4
          %s295 = int_to_ptr.vmem [resolvable:$true] %s294
          %300 = dma.hbm_to_vmem [thread:$0]  %s293, 1024, %s295, [#allocation11], 64, 64, 4
        $region28: #{tpu_custom_call.1} parent=11 // pred_fallthru
          _
        // Predicated region
        $region29: #{tpu_custom_call.1} parent=11 // pred_check
          %p301 = pneg %p170
        $region30: #{tpu_custom_call.1} parent=11 // pred_check_branch
          %303 = sbr.rel (%p301) target = $region32
        $region31: #{tpu_custom_call.1} parent=11 // pred_region
          _
        $region32: #{tpu_custom_call.1} parent=11 // pred_fallthru
          _
        // Predicated region
        $region33: #{tpu_custom_call.1} parent=11 // pred_check
          %p304 = pneg %p191
        $region34: #{tpu_custom_call.1} parent=11 // pred_check_branch
          %306 = sbr.rel (%p304) target = $region36
        $region35: #{tpu_custom_call.1} parent=11 // pred_region
          %308 = vsyncadd [#allocation11], 0
          %s309 = sshll.u32 %s6, 4
          %s310 = int_to_ptr.hbm [resolvable:$true] %s309
          %s311 = sshll.u32 [#allocation12], 4
          %s312 = int_to_ptr.vmem [resolvable:$true] %s311
          %317 = dma.hbm_to_vmem [thread:$0]  %s310, 1024, %s312, [#allocation11], 64, 64, 4
        $region36: #{tpu_custom_call.1} parent=11 // pred_fallthru
          _
        // Predicated region
        $region37: #{tpu_custom_call.1} parent=11 // pred_check
          %p318 = pneg %p212
        $region38: #{tpu_custom_call.1} parent=11 // pred_check_branch
          %320 = sbr.rel (%p318) target = $region40
        $region39: #{tpu_custom_call.1} parent=11 // pred_region
          _
        $region40: #{tpu_custom_call.1} parent=11 // pred_fallthru
          _
      $region12: #{tpu_custom_call.1} parent=5 // pred_fallthru
        _
      %p321 = scmp.lt.s32.totalorder %s20, 2
      // Predicated region
      $region41: #{tpu_custom_call.1} parent=5 // pred_check
        %p322 = pneg %p321
      $region42: #{tpu_custom_call.1} parent=5 // pred_check_branch
        %324 = sbr.rel (%p322) target = $region44
      $region43: #{tpu_custom_call.1} parent=5 // pred_region
        // Predicated region
        $region45: #{tpu_custom_call.1} parent=43 // pred_check
          %p325 = pneg %p54
        $region46: #{tpu_custom_call.1} parent=43 // pred_check_branch
          %327 = sbr.rel (%p325) target = $region48
        $region47: #{tpu_custom_call.1} parent=43 // pred_region
          %s328 = sand.u32 %s44, 1
          %s329 = scalar_lea.sflag [#allocation5], %s328
          %s330 = sand.u32 %s44, 1
          %s331 = smul.addr %s330, 16
          %s332 = scalar_lea.vmem [#allocation4], %s331
          %s333 = smul.u32 2, %s27
          %335 = vsyncadd %s329, 0
          %s336 = smul.addr %s28, 2
          %s337 = sadd.s32 %s333, %s336
          %s338 = smul.addr %s337, 8
          %s339 = scalar_lea.hbm %s0, %s338
          %s340 = sshll.u32 %s339, 4
          %s341 = int_to_ptr.hbm [resolvable:$true] %s340
          %s342 = sshll.u32 %s332, 4
          %s343 = int_to_ptr.vmem [resolvable:$true] %s342
          %348 = dma.hbm_to_vmem [thread:$0]  %s341, 256, %s343, %s329, 128, 128, 8
        $region48: #{tpu_custom_call.1} parent=43 // pred_fallthru
          _
      $region44: #{tpu_custom_call.1} parent=5 // pred_fallthru
        _
      %p349 = scmp.le.s32.totalorder 1, %s20
      %p350 = scmp.lt.s32.totalorder %s20, 3
      %p351 = pnand %p349, %p350
      %p352 = pneg %p351
      // Predicated region
      $region49: #{tpu_custom_call.1} parent=5 // pred_check
        _
      $region50: #{tpu_custom_call.1} parent=5 // pred_check_branch
        %354 = sbr.rel (%p351) target = $region52
      $region51: #{tpu_custom_call.1} parent=5 // pred_region
        %s355 = ssub.s32 %s20, 1
        %s356 = sand.u32 %s47, 1
        %s357 = scalar_lea.sflag [#allocation5], %s356
        %s358 = sand.u32 %s47, 1
        %s359 = smul.addr %s358, 16
        %s360 = scalar_lea.vmem [#allocation4], %s359
        // Predicated region
        $region53: #{tpu_custom_call.1} parent=51 // pred_check
          %p361 = pneg %p60
        $region54: #{tpu_custom_call.1} parent=51 // pred_check_branch
          %363 = sbr.rel (%p361) target = $region56
        $region55: #{tpu_custom_call.1} parent=51 // pred_region
          %365 = dma.done %s357, 256
        $region56: #{tpu_custom_call.1} parent=51 // pred_fallthru
          _
        // Predicated region
        $region57: #{tpu_custom_call.1} parent=51 // pred_check
          %p366 = pneg %p86
        $region58: #{tpu_custom_call.1} parent=51 // pred_check_branch
          %368 = sbr.rel (%p366) target = $region60
        $region59: #{tpu_custom_call.1} parent=51 // pred_region
          %370 = dma.done [#allocation8], 256
        $region60: #{tpu_custom_call.1} parent=51 // pred_fallthru
          _
        // Predicated region
        $region61: #{tpu_custom_call.1} parent=51 // pred_check
          %p371 = pneg %p107
        $region62: #{tpu_custom_call.1} parent=51 // pred_check_branch
          %373 = sbr.rel (%p371) target = $region64
        $region63: #{tpu_custom_call.1} parent=51 // pred_region
          %375 = dma.done [#allocation8], 128
        $region64: #{tpu_custom_call.1} parent=51 // pred_fallthru
          _
        // Predicated region
        $region65: #{tpu_custom_call.1} parent=51 // pred_check
          %p376 = pneg %p149
        $region66: #{tpu_custom_call.1} parent=51 // pred_check_branch
          %378 = sbr.rel (%p376) target = $region68
        $region67: #{tpu_custom_call.1} parent=51 // pred_region
          %380 = dma.done [#allocation11], 1024
        $region68: #{tpu_custom_call.1} parent=51 // pred_fallthru
          _
        // Predicated region
        $region69: #{tpu_custom_call.1} parent=51 // pred_check
          %p381 = pneg %p191
        $region70: #{tpu_custom_call.1} parent=51 // pred_check_branch
          %383 = sbr.rel (%p381) target = $region72
        $region71: #{tpu_custom_call.1} parent=51 // pred_region
          %385 = dma.done [#allocation11], 1024
        $region72: #{tpu_custom_call.1} parent=51 // pred_fallthru
          _
        %s386 = sand.u32 %s47, 1
        %s387 = scalar_lea.sflag [#allocation5], %s386
        %s388 = sand.u32 %s47, 1
        %s389 = smul.addr %s388, 16
        %s390 = scalar_lea.vmem [#allocation4], %s389
        %p391 = pneg %p60
        %p392 = pneg %p57
        %p393 = pneg %p86
        %p394 = pneg %p83
        %p395 = pneg %p107
        %p396 = pneg %p104
        %p397 = pneg %p128
        %p398 = pneg %p125
        %p399 = pneg %p149
        %p400 = pneg %p146
        %p401 = pneg %p170
        %p402 = pneg %p167
        %p403 = pneg %p191
        %p404 = pneg %p188
        %p405 = pneg %p212
        %p406 = pneg %p209
        %p407 = pneg %p238
        %p408 = pneg %p235
        %s409 = smul.u32 2, %s29
        %s410 = smul.u32 2, %s29
        %s411 = smul.u32 2, %s29
        %p413 = scmp.eq.s32.totalorder %s30, 0
        // Predicated region
        $region73: #{tpu_custom_call.1} parent=51 // pred_check
          %p414 = pneg %p413
        $region74: #{tpu_custom_call.1} parent=51 // pred_check_branch
          %416 = sbr.rel (%p414) target = $region76
        $region75: #{tpu_custom_call.1} parent=51 // pred_region
          %vm417 = vcmask 130048
          %418 = vst.msk [vmem:[#allocation2] sm:$0xff] %vm417, 0.0
          %419 = vst.msk [vmem:[#allocation2 + $0x8] sm:$0xff] %vm417, 0.0
          %v420 = vld [vmem:[#allocation7] sm:$0xff]
          %v421 = vld [vmem:[#allocation7 + $0x8] sm:$0xff]
          %v422 = vxor.u32 %v420, 2147483648
          %v423 = vxor.u32 %v421, 2147483648
          %v424 = vmul.f32 %v422, 1.442695
          %v425 = vpow.pop %v424
          %v426 = vmul.f32 %v423, 1.442695
          %v427 = vpow.pop %v426
          %v428 = vadd.f32 %v425, 1.0
          %v429 = vadd.f32 %v427, 1.0
          %v430 = vrcp.pop %v428
          %v431 = vmul.f32 %v428, %v430
          %v432 = vsub.f32 1.0, %v431
          %v433 = vmul.f32 %v430, %v432
          %v434 = vadd.f32 %v430, %v433
          %vm435 = vweird.f32 %v428
          %vm436 = vweird.f32 %v430
          %vm437 = vmor %vm435, %vm436
          %v438 = vsel %vm437, %v430, %v434
          %v439 = vand.u32 2147483647, %v428
          %vm440 = vcmp.eq.f32.partialorder %v439, 8.507059e+37
          %v441 = vand.u32 %v428, 2147483648
          %v442 = vor.u32 1.1754944e-38, %v441
          %v443 = vsel %vm440, %v442, %v438
          %v444 = vmul.f32 1.0, %v443
          %v445 = vrcp.pop %v429
          %v446 = vmul.f32 %v429, %v445
          %v447 = vsub.f32 1.0, %v446
          %v448 = vmul.f32 %v445, %v447
          %v449 = vadd.f32 %v445, %v448
          %vm450 = vweird.f32 %v429
          %vm451 = vweird.f32 %v445
          %vm452 = vmor %vm450, %vm451
          %v453 = vsel %vm452, %v445, %v449
          %v454 = vand.u32 2147483647, %v429
          %vm455 = vcmp.eq.f32.partialorder %v454, 8.507059e+37
          %v456 = vand.u32 %v429, 2147483648
          %v457 = vor.u32 1.1754944e-38, %v456
          %v458 = vsel %vm455, %v457, %v453
          %v459 = vmul.f32 1.0, %v458
          %460 = vst.msk [vmem:[#allocation3] sm:$0xff] %vm417, %v444
          %461 = vst.msk [vmem:[#allocation3 + $0x8] sm:$0xff] %vm417, %v459
        $region76: #{tpu_custom_call.1} parent=51 // pred_fallthru
          _
        %v462 = vld [vmem:[#allocation2] sm:$0xff]
        %v463 = vld [vmem:[#allocation2 + $0x8] sm:$0xff]
        %v464 = vld [vmem:[%s360] sm:$0xff]
        %v465 = vld [vmem:[%s360 + $0x8] sm:$0xff]
        %v466 = vadd.f32 %v462, %v464
        %v467 = vadd.f32 %v463, %v465
        %vm468 = vcmask 130048
        %469 = vst.msk [vmem:[#allocation2] sm:$0xff] %vm468, %v466
        %470 = vst.msk [vmem:[#allocation2 + $0x8] sm:$0xff] %vm468, %v467
        %p471 = scmp.eq.s32.totalorder %s30, 1
        // Predicated region
        $region77: #{tpu_custom_call.1} parent=51 // pred_check
          %p472 = pneg %p471
        $region78: #{tpu_custom_call.1} parent=51 // pred_check_branch
          %474 = sbr.rel (%p472) target = $region80
        $region79: #{tpu_custom_call.1} parent=51 // pred_region
          %v475 = vld [vmem:[#allocation2] sm:$0xff]
          %v476 = vld [vmem:[#allocation2 + $0x8] sm:$0xff]
          %v477 = vmul.f32 %v475, 0.5
          %v478 = vmul.f32 %v476, 0.5
          %v479 = vld [vmem:[#allocation3] sm:$0xff]
          %v480 = vld [vmem:[#allocation3 + $0x8] sm:$0xff]
          %v481 = vxor.u32 %v477, 2147483648
          %v482 = vxor.u32 %v478, 2147483648
          %v483 = vmul.f32 %v481, 1.442695
          %v484 = vpow.pop %v483
          %v485 = vmul.f32 %v482, 1.442695
          %v486 = vpow.pop %v485
          %v487 = vadd.f32 %v484, 1.0
          %v488 = vadd.f32 %v486, 1.0
          %v489 = vrcp.pop %v487
          %v490 = vmul.f32 %v487, %v489
          %v491 = vsub.f32 1.0, %v490
          %v492 = vmul.f32 %v489, %v491
          %v493 = vadd.f32 %v489, %v492
          %vm494 = vweird.f32 %v487
          %vm495 = vweird.f32 %v489
          %vm496 = vmor %vm494, %vm495
          %v497 = vsel %vm496, %v489, %v493
          %v498 = vand.u32 2147483647, %v487
          %vm499 = vcmp.eq.f32.partialorder %v498, 8.507059e+37
          %v500 = vand.u32 %v487, 2147483648
          %v501 = vor.u32 1.1754944e-38, %v500
          %v502 = vsel %vm499, %v501, %v497
          %v503 = vmul.f32 1.0, %v502
          %v504 = vrcp.pop %v488
          %v505 = vmul.f32 %v488, %v504
          %v506 = vsub.f32 1.0, %v505
          %v507 = vmul.f32 %v504, %v506
          %v508 = vadd.f32 %v504, %v507
          %vm509 = vweird.f32 %v488
          %vm510 = vweird.f32 %v504
          %vm511 = vmor %vm509, %vm510
          %v512 = vsel %vm511, %v504, %v508
          %v513 = vand.u32 2147483647, %v488
          %vm514 = vcmp.eq.f32.partialorder %v513, 8.507059e+37
          %v515 = vand.u32 %v488, 2147483648
          %v516 = vor.u32 1.1754944e-38, %v515
          %v517 = vsel %vm514, %v516, %v512
          %v518 = vmul.f32 1.0, %v517
          %v519 = vmul.f32 %v503, 0.5
          %v520 = vmul.f32 %v518, 0.5
          %v521 = vadd.f32 %v479, %v519
          %v522 = vadd.f32 %v480, %v520
          %v523 = vpack.c.bf16 %v522, %v521
          %v524 = vld [vmem:[#allocation9] sm:$0xf]
          %v525 = vld [vmem:[#allocation9 + $0x4] sm:$0xf]
          %v526 = vld [vmem:[%s3] sm:$0x1]
          %v528 = vperm.slane %v526, 0
          %v532 = vunpack.c.l.b16 %v524
          %v533 = vunpack.c.l.b16 %v525
          %v534 = vpack.c.b16 %v533, %v532
          %v537 = vsel %vm468, %v523, 0
          %539 = vmatpush.bf16.msra.mxu0 0
          %540 = vmatpush.bf16.msra.mxu0 0
          %541 = vmatpush.bf16.msra.mxu0 0
          %542 = vmatpush.bf16.msra.mxu0 0
          %543 = vmatpush.bf16.msra.mxu0 0
          %544 = vmatpush.bf16.msra.mxu0 0
          %545 = vmatpush.bf16.msra.mxu0 0
          %546 = vmatpush.bf16.msra.mxu0 %v534
          %547 = vmatmul.bf16.gmra.mxu0 %v537
          %v548 = vpop.f32.mrf.mxu0
          %v549 = vadd.f32 %v528, %v548
          %v550 = vpop.f32.mrf.mxu0
          %v551 = vadd.f32 %v528, %v550
          %552 = vdwg.mxu0
          %v553 = vmax.f32 %v549, 0.0
          %v554 = vmax.f32 %v551, 0.0
          %v555 = vpack.c.bf16 %v554, %v553
          %v556 = vld [vmem:[#allocation10] sm:$0xf]
          %v557 = vld [vmem:[#allocation10 + $0x4] sm:$0xf]
          %v558 = vld [vmem:[#allocation10 + $0x8] sm:$0xf]
          %v559 = vld [vmem:[#allocation10 + $0xc] sm:$0xf]
          %v560 = vld [vmem:[#allocation10 + $0x10] sm:$0xf]
          %v561 = vld [vmem:[#allocation10 + $0x14] sm:$0xf]
          %v562 = vld [vmem:[#allocation10 + $0x18] sm:$0xf]
          %v563 = vld [vmem:[#allocation10 + $0x1c] sm:$0xf]
          %v564 = vld [vmem:[#allocation10 + $0x20] sm:$0xf]
          %v565 = vld [vmem:[#allocation10 + $0x24] sm:$0xf]
          %v566 = vld [vmem:[#allocation10 + $0x28] sm:$0xf]
          %v567 = vld [vmem:[#allocation10 + $0x2c] sm:$0xf]
          %v568 = vld [vmem:[#allocation10 + $0x30] sm:$0xf]
          %v569 = vld [vmem:[#allocation10 + $0x34] sm:$0xf]
          %v570 = vld [vmem:[#allocation10 + $0x38] sm:$0xf]
          %v571 = vld [vmem:[#allocation10 + $0x3c] sm:$0xf]
          %v572 = vld [vmem:[%s5] sm:$0x1]
          %v574 = vperm.slane %v572, 0
          %v592 = vunpack.c.l.b16 %v556
          %v593 = vunpack.c.l.b16 %v557
          %v594 = vunpack.c.l.b16 %v558
          %v595 = vunpack.c.l.b16 %v559
          %v596 = vunpack.c.l.b16 %v560
          %v597 = vunpack.c.l.b16 %v561
          %v598 = vunpack.c.l.b16 %v562
          %v599 = vunpack.c.l.b16 %v563
          %v600 = vunpack.c.l.b16 %v564
          %v601 = vunpack.c.l.b16 %v565
          %v602 = vunpack.c.l.b16 %v566
          %v603 = vunpack.c.l.b16 %v567
          %v604 = vunpack.c.l.b16 %v568
          %v605 = vunpack.c.l.b16 %v569
          %v606 = vunpack.c.l.b16 %v570
          %v607 = vunpack.c.l.b16 %v571
          %v608 = vpack.c.b16 %v593, %v592
          %v609 = vpack.c.b16 %v595, %v594
          %v610 = vpack.c.b16 %v597, %v596
          %v611 = vpack.c.b16 %v599, %v598
          %v612 = vpack.c.b16 %v601, %v600
          %v613 = vpack.c.b16 %v603, %v602
          %v614 = vpack.c.b16 %v605, %v604
          %v615 = vpack.c.b16 %v607, %v606
          %624 = vmatpush.bf16.msra.mxu0 %v615
          %625 = vmatpush.bf16.msra.mxu0 %v614
          %626 = vmatpush.bf16.msra.mxu0 %v613
          %627 = vmatpush.bf16.msra.mxu0 %v612
          %628 = vmatpush.bf16.msra.mxu0 %v611
          %629 = vmatpush.bf16.msra.mxu0 %v610
          %630 = vmatpush.bf16.msra.mxu0 %v609
          %631 = vmatpush.bf16.msra.mxu0 %v608
          %632 = vmatmul.bf16.gmra.mxu0 %v555
          %v633 = vpop.f32.mrf.mxu0
          %v634 = vadd.f32 %v574, %v633
          %v635 = vpop.f32.mrf.mxu0
          %v636 = vadd.f32 %v574, %v635
          %637 = vdwg.mxu0
          %v638 = vmax.f32 %v634, 0.0
          %v639 = vmax.f32 %v636, 0.0
          %v640 = vpack.c.bf16 %v639, %v638
          %v641 = vld [vmem:[#allocation12] sm:$0xf]
          %v642 = vld [vmem:[#allocation12 + $0x4] sm:$0xf]
          %v643 = vld [vmem:[#allocation12 + $0x8] sm:$0xf]
          %v644 = vld [vmem:[#allocation12 + $0xc] sm:$0xf]
          %v645 = vld [vmem:[#allocation12 + $0x10] sm:$0xf]
          %v646 = vld [vmem:[#allocation12 + $0x14] sm:$0xf]
          %v647 = vld [vmem:[#allocation12 + $0x18] sm:$0xf]
          %v648 = vld [vmem:[#allocation12 + $0x1c] sm:$0xf]
          %v649 = vld [vmem:[#allocation12 + $0x20] sm:$0xf]
          %v650 = vld [vmem:[#allocation12 + $0x24] sm:$0xf]
          %v651 = vld [vmem:[#allocation12 + $0x28] sm:$0xf]
          %v652 = vld [vmem:[#allocation12 + $0x2c] sm:$0xf]
          %v653 = vld [vmem:[#allocation12 + $0x30] sm:$0xf]
          %v654 = vld [vmem:[#allocation12 + $0x34] sm:$0xf]
          %v655 = vld [vmem:[#allocation12 + $0x38] sm:$0xf]
          %v656 = vld [vmem:[#allocation12 + $0x3c] sm:$0xf]
          %v657 = vld [vmem:[%s7] sm:$0x1]
          %v659 = vperm.slane %v657, 0
          %v677 = vunpack.c.l.b16 %v641
          %v678 = vunpack.c.l.b16 %v642
          %v679 = vunpack.c.l.b16 %v643
          %v680 = vunpack.c.l.b16 %v644
          %v681 = vunpack.c.l.b16 %v645
          %v682 = vunpack.c.l.b16 %v646
          %v683 = vunpack.c.l.b16 %v647
          %v684 = vunpack.c.l.b16 %v648
          %v685 = vunpack.c.l.b16 %v649
          %v686 = vunpack.c.l.b16 %v650
          %v687 = vunpack.c.l.b16 %v651
          %v688 = vunpack.c.l.b16 %v652
          %v689 = vunpack.c.l.b16 %v653
          %v690 = vunpack.c.l.b16 %v654
          %v691 = vunpack.c.l.b16 %v655
          %v692 = vunpack.c.l.b16 %v656
          %v693 = vpack.c.b16 %v678, %v677
          %v694 = vpack.c.b16 %v680, %v679
          %v695 = vpack.c.b16 %v682, %v681
          %v696 = vpack.c.b16 %v684, %v683
          %v697 = vpack.c.b16 %v686, %v685
          %v698 = vpack.c.b16 %v688, %v687
          %v699 = vpack.c.b16 %v690, %v689
          %v700 = vpack.c.b16 %v692, %v691
          %709 = vmatpush.bf16.msra.mxu0 %v700
          %710 = vmatpush.bf16.msra.mxu0 %v699
          %711 = vmatpush.bf16.msra.mxu0 %v698
          %712 = vmatpush.bf16.msra.mxu0 %v697
          %713 = vmatpush.bf16.msra.mxu0 %v696
          %714 = vmatpush.bf16.msra.mxu0 %v695
          %715 = vmatpush.bf16.msra.mxu0 %v694
          %716 = vmatpush.bf16.msra.mxu0 %v693
          %717 = vmatmul.bf16.gmra.mxu0 %v640
          %v718 = vpop.f32.mrf.mxu0
          %v719 = vadd.f32 %v659, %v718
          %v720 = vpop.f32.mrf.mxu0
          %v721 = vadd.f32 %v659, %v720
          %722 = vdwg.mxu0
          %v723 = vmax.f32 %v719, 0.0
          %v724 = vmax.f32 %v721, 0.0
          %725 = vst [vmem:[#allocation13] sm:$0xff] %v723
          %726 = vst [vmem:[#allocation13 + $0x8] sm:$0xff] %v724
        $region80: #{tpu_custom_call.1} parent=51 // pred_fallthru
          _
        // Predicated region
        $region81: #{tpu_custom_call.1} parent=51 // pred_check
          %p727 = pneg %p235
        $region82: #{tpu_custom_call.1} parent=51 // pred_check_branch
          %729 = sbr.rel (%p727) target = $region84
        $region83: #{tpu_custom_call.1} parent=51 // pred_region
          %s730 = smul.u32 2, %s29
          %732 = vsyncadd [#allocation6], 0
          %s733 = smul.addr %s730, 8
          %s734 = scalar_lea.hbm %s8, %s733
          %s735 = sshll.u32 [#allocation13], 4
          %s736 = int_to_ptr.vmem [resolvable:$true] %s735
          %s737 = sshll.u32 %s734, 4
          %s738 = int_to_ptr.hbm [resolvable:$true] %s737
          %743 = dma.vmem_to_hbm [thread:$0]  %s736, 256, %s738, [#allocation6], 128, 128, 8
        $region84: #{tpu_custom_call.1} parent=51 // pred_fallthru
          _
        // Predicated region
        $region85: #{tpu_custom_call.1} parent=51 // pred_check
          %p744 = pneg %p235
        $region86: #{tpu_custom_call.1} parent=51 // pred_check_branch
          %746 = sbr.rel (%p744) target = $region88
        $region87: #{tpu_custom_call.1} parent=51 // pred_region
          %748 = dma.done [#allocation6], 256
        $region88: #{tpu_custom_call.1} parent=51 // pred_fallthru
          _
      $region52: #{tpu_custom_call.1} parent=5 // pred_fallthru
        _
      %p749 = scmp.le.s32.totalorder 2, %s20
      // Predicated region
      $region89: #{tpu_custom_call.1} parent=5 // pred_check
        %p750 = pneg %p749
      $region90: #{tpu_custom_call.1} parent=5 // pred_check_branch
        %752 = sbr.rel (%p750) target = $region92
      $region91: #{tpu_custom_call.1} parent=5 // pred_region
        %s753 = ssub.s32 %s20, 2
      $region92: #{tpu_custom_call.1} parent=5 // pred_fallthru
        _
    $region6: #{tpu_custom_call.1} parent=1 // loop_footer
      %s24 = sadd.s32 1, %s20
    $region7: #{tpu_custom_call.1} parent=1 // loop_footer_branch
      %19 = sbr.rel target = $region3
    $region8: #{tpu_custom_call.1} parent=1 // loop_exit
      _
    %754 = vsyncpa [#allocation5], 1
    %s755 = scalar_lea.sflag [#allocation5], 1
    %756 = vsyncpa %s755, 1
    %757 = vsyncpa [#allocation8], 1
    %758 = vsyncpa [#allocation11], 1
    %759 = vsyncpa [#allocation6], 1
    %s760 = scalar_lea.sflag [#allocation6], 1
    %761 = vsyncpa %s760, 1

</llo_original>
